<compile_context>
chip_gen: v7x
topology: tpu7x:2x2x1
jax: 0.10.0
libtpu: 0.0.40
codegen_flags: <defaults>
</compile_context>

<pallas_src>
import jax
import jax.numpy as jnp
from jax.experimental import pallas as pl
from jax.experimental.pallas import tpu as pltpu

_LANES = 128
_SUBLANES = 8
_MAX_BLOCK_ROWS = 4096          # 4096 x 128 f32 = 2 MiB per input tile
_PALLAS_MIN_ELEMS = 4096        # below this, launch overhead dominates -> jnp


# --------------------------------------------------------------------------
# Pallas pair-reduction kernel
# --------------------------------------------------------------------------

def _make_pair_reduce_kernel(elem_fn, n_out, block_rows):
    """Elementwise op on two (block_rows, 128) tiles, accumulating per-component
    partial sums into a resident (n_out, 8, 128) f32 output block."""
    groups = block_rows // _SUBLANES

    def kernel(a_ref, b_ref, o_ref):
        @pl.when(pl.program_id(0) == 0)
        def _():
            o_ref[...] = jnp.zeros_like(o_ref)

        a = a_ref[...].astype(jnp.float32)
        b = b_ref[...].astype(jnp.float32)
        for idx, v in enumerate(elem_fn(a, b)):
            # (block_rows,128) -> (groups,8,128); reducing the leading axis is
            # pure vreg adds on the VPU (no XLU traffic, no narrow stores).
            o_ref[idx] += jnp.sum(v.reshape(groups, _SUBLANES, _LANES), axis=0)

    return kernel


def _pallas_pair_sums(a_slab, b_slab, elem_fn, n_out, block_rows):
    """Tiled reduction over two matching (rows,128) slabs; returns f32[n_out]."""
    rows = a_slab.shape[0]
    grid = (rows // block_rows,)
    in_spec = pl.BlockSpec((block_rows, _LANES), lambda i: (i, 0))

    out = pl.pallas_call(
        _make_pair_reduce_kernel(elem_fn, n_out, block_rows),
        out_shape=jax.ShapeDtypeStruct((n_out, _SUBLANES, _LANES), jnp.float32),
        grid_spec=pltpu.PrefetchScalarGridSpec(
            num_scalar_prefetch=0,
            grid=grid,
            in_specs=[in_spec, in_spec],
            out_specs=pl.BlockSpec((n_out, _SUBLANES, _LANES),
                                   lambda i: (0, 0, 0)),
        ),
        compiler_params=pltpu.CompilerParams(
            dimension_semantics=("arbitrary",),
            vmem_limit_bytes=32 * 1024 * 1024,
        ),
    )(a_slab, b_slab)

    # Collapse the tiny (n_out, 8, 128) partial-sum block to n_out scalars.
    return jnp.sum(out, axis=(1, 2))


def _choose_block_rows(rows):
    """Largest divisor of rows that is a multiple of 8 and <= _MAX_BLOCK_ROWS."""
    cap = min(_MAX_BLOCK_ROWS, rows)
    cap -= cap % _SUBLANES
    for d in range(cap, _SUBLANES - 1, -_SUBLANES):
        if rows % d == 0:
            return d
    return _SUBLANES  # unreachable when rows % 8 == 0


def _pair_sums(a, b, elem_fn, n_out):
    """Global reduction of elem_fn over flattened (a, b); returns f32[n_out]."""
    a_flat = jnp.ravel(a)
    b_flat = jnp.ravel(b)
    n = a_flat.shape[0]
    quantum = _SUBLANES * _LANES

    if n < _PALLAS_MIN_ELEMS or n % quantum != 0:
        # Tiny or not (8,128)-aligned: a fused XLA reduction is a single pass
        # over the data with no launch overhead and no padded copy.
        vals = elem_fn(a_flat.astype(jnp.float32), b_flat.astype(jnp.float32))
        return jnp.stack([jnp.sum(v) for v in vals])

    rows = n // _LANES
    block_rows = _choose_block_rows(rows)
    # Reshape of contiguous data -> layout bitcast, no HBM copy; the Pallas
    # kernel reads each input exactly once in its native dtype.
    a_slab = a_flat.reshape(rows, _LANES)
    b_slab = b_flat.reshape(rows, _LANES)
    return _pallas_pair_sums(a_slab, b_slab, elem_fn, n_out, block_rows)


# ---- elementwise bodies (run on f32 tiles inside the kernel / jnp path) ----

def _bce_elems(p, t):
    # Matches torch.nn.functional.binary_cross_entropy: log terms clamped at -100.
    log_p = jnp.maximum(jnp.log(p), -100.0)
    log_1mp = jnp.maximum(jnp.log1p(-p), -100.0)
    return (-(t * log_p + (1.0 - t) * log_1mp),)


def _dice_elems(t, p):
    return (t * p, t + p)


def _l1_elems(a, b):
    return (jnp.abs(a - b),)


def _mse_elems(a, b):
    return ((a - b) * (a - b),)


# --------------------------------------------------------------------------
# Loss computation (fully jittable; scalar glue around the reductions)
# --------------------------------------------------------------------------

def _mtl_loss_impl(pred_cls, pred_seg, pred_rec, label, mask, image,
                   pooled_seg=None):
    n_cls = pred_cls.size

    # classification: BCE mean (tiny -> fused jnp path inside _pair_sums).
    cls_loss = _pair_sums(pred_cls, label, _bce_elems, 1)[0] / n_cls

    # segmentation: binary dice; the (bs,1,-1) view summed over dims (0,2)
    # is exactly a global sum, so one pair-reduction suffices.
    dsums = _pair_sums(mask, pred_seg, _dice_elems, 2)
    intersection, cardinality = dsums[0], dsums[1]
    smooth, eps = 0.0, 1e-7
    dice_score = (2.0 * intersection + smooth) / jnp.maximum(cardinality + smooth, eps)
    seg_loss = 1.0 - dice_score      # single "channel" -> mean is identity

    # reconstruction: mean L1.
    rec_loss = _pair_sums(pred_rec, image, _l1_elems, 1)[0] / pred_rec.size

    base_total = cls_loss + seg_loss + rec_loss

    if pooled_seg is not None:
        consist_loss = _pair_sums(pred_cls, pooled_seg, _mse_elems, 1)[0] / n_cls
        total_loss = base_total + consist_loss
        return total_loss, base_total, cls_loss, seg_loss, rec_loss, consist_loss
    return base_total, base_total, cls_loss, seg_loss, rec_loss, None


_mtl_loss_jit = jax.jit(_mtl_loss_impl)


def mtl_loss(pred_cls, pred_seg, pred_rec, label, mask, image, pooled_seg=None):
    assert pred_cls.shape == label.shape, f"{pred_cls.shape} != {label.shape}"
    assert pred_seg.shape == mask.shape, f"{pred_seg.shape} != {mask.shape}"
    assert pred_rec.shape == image.shape, f"{pred_rec.shape} != {image.shape}"
    if pooled_seg is not None:
        assert pooled_seg.shape == pred_cls.shape, \
            f"{pooled_seg.shape} != {pred_cls.shape}"

    results = _mtl_loss_jit(pred_cls, pred_seg, pred_rec, label, mask, image,
                            pooled_seg)
    total = results[0]

    # one device->host transfer for all scalars (the .item()s of the reference)
    total_h, base_h, cls_h, seg_h, rec_h, consist_h = jax.device_get(results)

    # NOTE: matches the PyTorch reference: loss_dict['total_loss'] excludes the
    # consistency term, while the returned total includes it.
    loss_dict = {
        "total_loss": float(base_h),
        "cls_loss": float(cls_h),
        "seg_loss": float(seg_h),
        "rec_loss": float(rec_h),
    }
    if consist_h is not None:
        loss_dict["consist_loss"] = float(consist_h)
    return total, loss_dict


# --------------------------------------------------------------------------
# Demo / smoke test
# --------------------------------------------------------------------------

if __name__ == "__main__":
    key = jax.random.PRNGKey(0)
    k1, k2, k3, k4, k5, k6, k7 = jax.random.split(key, 7)

    B, C, H, W = 2, 4, 64, 64  # small shapes; seg & rec exercise the Pallas path

    # classification head: probabilities in (0,1), labels in {0,1}
    pred_cls = jax.nn.sigmoid(jax.random.normal(k1, (B, 1), jnp.float32))
    label = jax.random.bernoulli(k2, 0.5, (B, 1)).astype(jnp.float32)

    # segmentation head: NCHW probabilities / binary mask
    pred_seg = jax.nn.sigmoid(jax.random.normal(k3, (B, 1, H, W), jnp.float32))
    mask = jax.random.bernoulli(k4, 0.3, (B, 1, H, W)).astype(jnp.float32)

    # reconstruction head: NCHW image-like tensors
    pred_rec = jax.random.uniform(k5, (B, C, H, W), jnp.float32)
    image = jax.random.uniform(k6, (B, C, H, W), jnp.float32)

    # optional consistency target (same shape as pred_cls)
    pooled_seg = jax.nn.sigmoid(jax.random.normal(k7, (B, 1), jnp.float32))

    total, ldict = mtl_loss(pred_cls, pred_seg, pred_rec, label, mask, image,
                            pooled_seg=pooled_seg)
    jax.block_until_ready(total)

    # lightweight correctness check against a plain-jnp reference
    def _ref_total():
        p, t = pred_cls, label
        bce = jnp.mean(-(t * jnp.maximum(jnp.log(p), -100.0)
                         + (1.0 - t) * jnp.maximum(jnp.log1p(-p), -100.0)))
        inter = jnp.sum(mask * pred_seg)
        card = jnp.sum(mask + pred_seg)
        dice = 1.0 - (2.0 * inter) / jnp.maximum(card, 1e-7)
        l1 = jnp.mean(jnp.abs(pred_rec - image))
        mse = jnp.mean((pred_cls - pooled_seg) ** 2)
        return bce + dice + l1 + mse

    ref = float(_ref_total())
    got = float(total)
    assert abs(got - ref) <= 1e-4 * max(1.0, abs(ref)), (got, ref)

    print("KERNEL_OK")
</pallas_src>

<mosaic_0001>
module attributes {stable_mosaic.version = 11 : i64} {
  func.func @kernel(%arg0: i32, %arg1: memref<64x128xf32, #tpu.memory_space<vmem>>, %arg2: memref<64x128xf32, #tpu.memory_space<vmem>>, %arg3: memref<2x8x128xf32, #tpu.memory_space<vmem>>) attributes {dimension_semantics = [#tpu.dimension_semantics<arbitrary>], iteration_bounds = array<i64: 1>, scalar_prefetch = 0 : i64, scratch_operands = 0 : i64, tpu.core_type = #tpu.core_type<tc>, window_params = [{transform_indices = @transform_0, window_bounds = array<i64: 64, 128>}, {transform_indices = @transform_1, window_bounds = array<i64: 64, 128>}, {pipeline_mode = #tpu.pipeline_mode<synchronous>, transform_indices = @transform_2, window_bounds = array<i64: 2, 8, 128>}]} {
    %c0_i32 = arith.constant 0 : i32
    %0 = arith.cmpi eq, %arg0, %c0_i32 : i32
    %1 = arith.extui %0 : i1 to i32
    %c0_i32_0 = arith.constant 0 : i32
    %2 = arith.cmpi ne, %1, %c0_i32_0 : i32
    scf.if %2 {
      %cst_16 = arith.constant 0.000000e+00 : f32
      %23 = vector.broadcast %cst_16 : f32 to vector<2x8x128xf32>
      %c0_17 = arith.constant 0 : index
      %c0_18 = arith.constant 0 : index
      %c0_19 = arith.constant 0 : index
      %24 = vector.load %arg3[%c0_17, %c0_18, %c0_19] : memref<2x8x128xf32, #tpu.memory_space<vmem>>, vector<2x8x128xf32>
      tpu.vector_store %arg3[%c0_17, %c0_18, %c0_19], %23 {strides = array<i32>} : memref<2x8x128xf32, #tpu.memory_space<vmem>>, vector<2x8x128xf32>,
    } else {
    }
    %c0 = arith.constant 0 : index
    %c0_1 = arith.constant 0 : index
    %3 = vector.load %arg1[%c0, %c0_1] : memref<64x128xf32, #tpu.memory_space<vmem>>, vector<64x128xf32>
    %c0_2 = arith.constant 0 : index
    %c0_3 = arith.constant 0 : index
    %4 = vector.load %arg2[%c0_2, %c0_3] : memref<64x128xf32, #tpu.memory_space<vmem>>, vector<64x128xf32>
    %5 = arith.mulf %3, %4 : vector<64x128xf32>
    %6 = arith.addf %3, %4 : vector<64x128xf32>
    %c0_4 = arith.constant 0 : index
    %c0_5 = arith.constant 0 : index
    %c0_6 = arith.constant 0 : index
    %7 = vector.load %arg3[%c0_4, %c0_5, %c0_6] : memref<2x8x128xf32, #tpu.memory_space<vmem>>, vector<1x8x128xf32>
    %8 = vector.shape_cast %7 : vector<1x8x128xf32> to vector<8x128xf32>
    %9 = vector.shape_cast %5 : vector<64x128xf32> to vector<8x8x128xf32>
    %cst = arith.constant dense<0.000000e+00> : vector<8x128xf32>
    %10 = vector.multi_reduction <add>, %9, %cst [0] : vector<8x8x128xf32> to vector<8x128xf32>
    %11 = arith.addf %8, %10 : vector<8x128xf32>
    %c0_7 = arith.constant 0 : index
    %c0_8 = arith.constant 0 : index
    %c0_9 = arith.constant 0 : index
    %12 = vector.load %arg3[%c0_7, %c0_8, %c0_9] : memref<2x8x128xf32, #tpu.memory_space<vmem>>, vector<1x8x128xf32>
    %13 = vector.shape_cast %12 : vector<1x8x128xf32> to vector<8x128xf32>
    %14 = vector.shape_cast %11 : vector<8x128xf32> to vector<1x8x128xf32>
    tpu.vector_store %arg3[%c0_7, %c0_8, %c0_9], %14 {strides = array<i32>} : memref<2x8x128xf32, #tpu.memory_space<vmem>>, vector<1x8x128xf32>,
    %c1 = arith.constant 1 : index
    %c0_10 = arith.constant 0 : index
    %c0_11 = arith.constant 0 : index
    %15 = vector.load %arg3[%c1, %c0_10, %c0_11] : memref<2x8x128xf32, #tpu.memory_space<vmem>>, vector<1x8x128xf32>
    %16 = vector.shape_cast %15 : vector<1x8x128xf32> to vector<8x128xf32>
    %17 = vector.shape_cast %6 : vector<64x128xf32> to vector<8x8x128xf32>
    %cst_12 = arith.constant dense<0.000000e+00> : vector<8x128xf32>
    %18 = vector.multi_reduction <add>, %17, %cst_12 [0] : vector<8x8x128xf32> to vector<8x128xf32>
    %19 = arith.addf %16, %18 : vector<8x128xf32>
    %c1_13 = arith.constant 1 : index
    %c0_14 = arith.constant 0 : index
    %c0_15 = arith.constant 0 : index
    %20 = vector.load %arg3[%c1_13, %c0_14, %c0_15] : memref<2x8x128xf32, #tpu.memory_space<vmem>>, vector<1x8x128xf32>
    %21 = vector.shape_cast %20 : vector<1x8x128xf32> to vector<8x128xf32>
    %22 = vector.shape_cast %19 : vector<8x128xf32> to vector<1x8x128xf32>
    tpu.vector_store %arg3[%c1_13, %c0_14, %c0_15], %22 {strides = array<i32>} : memref<2x8x128xf32, #tpu.memory_space<vmem>>, vector<1x8x128xf32>,
    return
  }
  func.func @transform_0(%arg0: i32) -> (i32, i32) {
    %c0_i32 = arith.constant 0 : i32
    %c0_i32_0 = arith.constant 0 : i32
    return %arg0, %c0_i32 : i32, i32
  }
  func.func @transform_1(%arg0: i32) -> (i32, i32) {
    %c0_i32 = arith.constant 0 : i32
    %c0_i32_0 = arith.constant 0 : i32
    return %arg0, %c0_i32 : i32, i32
  }
  func.func @transform_2(%arg0: i32) -> (i32, i32, i32) {
    %c0_i32 = arith.constant 0 : i32
    %c0_i32_0 = arith.constant 0 : i32
    %c0_i32_1 = arith.constant 0 : i32
    %c0_i32_2 = arith.constant 0 : i32
    return %c0_i32, %c0_i32_0, %c0_i32_1 : i32, i32, i32
  }
}

module attributes {stable_mosaic.version = 11 : i64} {
  func.func @kernel(%arg0: i32, %arg1: memref<256x128xf32, #tpu.memory_space<vmem>>, %arg2: memref<256x128xf32, #tpu.memory_space<vmem>>, %arg3: memref<1x8x128xf32, #tpu.memory_space<vmem>>) attributes {dimension_semantics = [#tpu.dimension_semantics<arbitrary>], iteration_bounds = array<i64: 1>, scalar_prefetch = 0 : i64, scratch_operands = 0 : i64, tpu.core_type = #tpu.core_type<tc>, window_params = [{transform_indices = @transform_0, window_bounds = array<i64: 256, 128>}, {transform_indices = @transform_1, window_bounds = array<i64: 256, 128>}, {pipeline_mode = #tpu.pipeline_mode<synchronous>, transform_indices = @transform_2, window_bounds = array<i64: 1, 8, 128>}]} {
    %c0_i32 = arith.constant 0 : i32
    %0 = arith.cmpi eq, %arg0, %c0_i32 : i32
    %1 = arith.extui %0 : i1 to i32
    %c0_i32_0 = arith.constant 0 : i32
    %2 = arith.cmpi ne, %1, %c0_i32_0 : i32
    scf.if %2 {
      %cst_10 = arith.constant 0.000000e+00 : f32
      %15 = vector.broadcast %cst_10 : f32 to vector<1x8x128xf32>
      %c0_11 = arith.constant 0 : index
      %c0_12 = arith.constant 0 : index
      %c0_13 = arith.constant 0 : index
      %16 = vector.load %arg3[%c0_11, %c0_12, %c0_13] : memref<1x8x128xf32, #tpu.memory_space<vmem>>, vector<1x8x128xf32>
      tpu.vector_store %arg3[%c0_11, %c0_12, %c0_13], %15 {strides = array<i32>} : memref<1x8x128xf32, #tpu.memory_space<vmem>>, vector<1x8x128xf32>,
    } else {
    }
    %c0 = arith.constant 0 : index
    %c0_1 = arith.constant 0 : index
    %3 = vector.load %arg1[%c0, %c0_1] : memref<256x128xf32, #tpu.memory_space<vmem>>, vector<256x128xf32>
    %c0_2 = arith.constant 0 : index
    %c0_3 = arith.constant 0 : index
    %4 = vector.load %arg2[%c0_2, %c0_3] : memref<256x128xf32, #tpu.memory_space<vmem>>, vector<256x128xf32>
    %5 = arith.subf %3, %4 : vector<256x128xf32>
    %6 = math.absf %5 : vector<256x128xf32>
    %c0_4 = arith.constant 0 : index
    %c0_5 = arith.constant 0 : index
    %c0_6 = arith.constant 0 : index
    %7 = vector.load %arg3[%c0_4, %c0_5, %c0_6] : memref<1x8x128xf32, #tpu.memory_space<vmem>>, vector<1x8x128xf32>
    %8 = vector.shape_cast %7 : vector<1x8x128xf32> to vector<8x128xf32>
    %9 = vector.shape_cast %6 : vector<256x128xf32> to vector<32x8x128xf32>
    %cst = arith.constant dense<0.000000e+00> : vector<8x128xf32>
    %10 = vector.multi_reduction <add>, %9, %cst [0] : vector<32x8x128xf32> to vector<8x128xf32>
    %11 = arith.addf %8, %10 : vector<8x128xf32>
    %c0_7 = arith.constant 0 : index
    %c0_8 = arith.constant 0 : index
    %c0_9 = arith.constant 0 : index
    %12 = vector.load %arg3[%c0_7, %c0_8, %c0_9] : memref<1x8x128xf32, #tpu.memory_space<vmem>>, vector<1x8x128xf32>
    %13 = vector.shape_cast %12 : vector<1x8x128xf32> to vector<8x128xf32>
    %14 = vector.shape_cast %11 : vector<8x128xf32> to vector<1x8x128xf32>
    tpu.vector_store %arg3[%c0_7, %c0_8, %c0_9], %14 {strides = array<i32>} : memref<1x8x128xf32, #tpu.memory_space<vmem>>, vector<1x8x128xf32>,
    return
  }
  func.func @transform_0(%arg0: i32) -> (i32, i32) {
    %c0_i32 = arith.constant 0 : i32
    %c0_i32_0 = arith.constant 0 : i32
    return %arg0, %c0_i32 : i32, i32
  }
  func.func @transform_1(%arg0: i32) -> (i32, i32) {
    %c0_i32 = arith.constant 0 : i32
    %c0_i32_0 = arith.constant 0 : i32
    return %arg0, %c0_i32 : i32, i32
  }
  func.func @transform_2(%arg0: i32) -> (i32, i32, i32) {
    %c0_i32 = arith.constant 0 : i32
    %c0_i32_0 = arith.constant 0 : i32
    %c0_i32_1 = arith.constant 0 : i32
    %c0_i32_2 = arith.constant 0 : i32
    return %c0_i32, %c0_i32_0, %c0_i32_1 : i32, i32, i32
  }
}

</mosaic_0001>

<llo_original>
// kernel: _mtl_loss_impl.2
$region0: #{_mtl_loss_impl.2}
  #allocation0 [shape = 'u32[]', space=smem, size = 0x4, offset = 0x4, fixed_abs, tag = 'smem constant byte address 0x4 - core index']
  #allocation1 [shape = 'u32[144,128]{1,0:T(1,128)}', space=vmem, size = 0x12000, scoped, tag = 'internal scratch']
  %s0 = inlined_call_operand.vmem [shape: f32[64,128], index: 0, kind: input, shape index: {}]
  %s1 = inlined_call_operand.vmem [shape: f32[64,128], index: 1, kind: input, shape index: {}]
  %s2 = inlined_call_operand.vmem [shape: f32[2,8,128], index: 2, kind: output, shape index: {}]
  %s3 = sld [smem:[#allocation0]]
  $region22: #{_mtl_loss_impl.2} parent=0
    _
  %s5 = ssub.s32 1, %s3
  %s6 = scalar_select 0, %s5, %s3
  // Predicated region
  $region2: #{_mtl_loss_impl.2} parent=0 // pred_check
    _
  $region3: #{_mtl_loss_impl.2} parent=0 // pred_check_branch
    %8 = sbr.rel (0) target = $region5
  $region4: #{_mtl_loss_impl.2} parent=0 // pred_region
    _
  $region5: #{_mtl_loss_impl.2} parent=0 // pred_fallthru
    _
  // Predicated region
  $region6: #{_mtl_loss_impl.2} parent=0 // pred_check
    _
  $region7: #{_mtl_loss_impl.2} parent=0 // pred_check_branch
    %10 = sbr.rel (0) target = $region9
  $region8: #{_mtl_loss_impl.2} parent=0 // pred_region
    _
  $region9: #{_mtl_loss_impl.2} parent=0 // pred_fallthru
    _
  %p11 = scmp.eq.s32.totalorder 0, 0
  // Predicated region
  $region10: #{_mtl_loss_impl.2} parent=0 // pred_check
    %p12 = pneg %p11
  $region11: #{_mtl_loss_impl.2} parent=0 // pred_check_branch
    %14 = sbr.rel (%p12) target = $region13
  $region12: #{_mtl_loss_impl.2} parent=0 // pred_region
    %15 = vst [vmem:[%s2] sm:$0xff] 0.0
    %16 = vst [vmem:[%s2 + $0x8] sm:$0xff] 0.0
  $region13: #{_mtl_loss_impl.2} parent=0 // pred_fallthru
    _
  %v17 = vld [vmem:[%s0] sm:$0xff]
  %v18 = vld [vmem:[%s0 + $0x8] sm:$0xff]
  %v19 = vld [vmem:[%s0 + $0x10] sm:$0xff]
  %v20 = vld [vmem:[%s0 + $0x18] sm:$0xff]
  %v21 = vld [vmem:[%s0 + $0x20] sm:$0xff]
  %v22 = vld [vmem:[%s0 + $0x28] sm:$0xff]
  %v23 = vld [vmem:[%s0 + $0x30] sm:$0xff]
  %v24 = vld [vmem:[%s0 + $0x38] sm:$0xff]
  %v25 = vld [vmem:[%s1] sm:$0xff]
  %v26 = vld [vmem:[%s1 + $0x8] sm:$0xff]
  %v27 = vld [vmem:[%s1 + $0x10] sm:$0xff]
  %v28 = vld [vmem:[%s1 + $0x18] sm:$0xff]
  %v29 = vld [vmem:[%s1 + $0x20] sm:$0xff]
  %v30 = vld [vmem:[%s1 + $0x28] sm:$0xff]
  %v31 = vld [vmem:[%s1 + $0x30] sm:$0xff]
  %v32 = vld [vmem:[%s1 + $0x38] sm:$0xff]
  %v33 = vmul.f32 %v17, %v25
  %v34 = vmul.f32 %v18, %v26
  %v35 = vmul.f32 %v19, %v27
  %v36 = vmul.f32 %v20, %v28
  %v37 = vmul.f32 %v21, %v29
  %v38 = vmul.f32 %v22, %v30
  %v39 = vmul.f32 %v23, %v31
  %v40 = vmul.f32 %v24, %v32
  %v41 = vadd.f32 %v17, %v25
  %v42 = vadd.f32 %v18, %v26
  %v43 = vadd.f32 %v19, %v27
  %v44 = vadd.f32 %v20, %v28
  %v45 = vadd.f32 %v21, %v29
  %v46 = vadd.f32 %v22, %v30
  %v47 = vadd.f32 %v23, %v31
  %v48 = vadd.f32 %v24, %v32
  %v49 = vld [vmem:[%s2] sm:$0xff]
  %v50 = vadd.f32 %v33, %v34
  %v51 = vadd.f32 %v50, %v35
  %v52 = vadd.f32 %v51, %v36
  %v53 = vadd.f32 %v52, %v37
  %v54 = vadd.f32 %v53, %v38
  %v55 = vadd.f32 %v54, %v39
  %v56 = vadd.f32 %v55, %v40
  %v57 = vadd.f32 %v49, %v56
  %58 = vst [vmem:[%s2] sm:$0xff] %v57
  %s59 = scalar_lea.vmem %s2, 8
  %v60 = vld [vmem:[%s59] sm:$0xff]
  %v61 = vadd.f32 %v41, %v42
  %v62 = vadd.f32 %v61, %v43
  %v63 = vadd.f32 %v62, %v44
  %v64 = vadd.f32 %v63, %v45
  %v65 = vadd.f32 %v64, %v46
  %v66 = vadd.f32 %v65, %v47
  %v67 = vadd.f32 %v66, %v48
  %v68 = vadd.f32 %v60, %v67
  %69 = vst [vmem:[%s59] sm:$0xff] %v68
  // Predicated region
  $region14: #{_mtl_loss_impl.2} parent=0 // pred_check
    _
  $region15: #{_mtl_loss_impl.2} parent=0 // pred_check_branch
    %71 = sbr.rel (0) target = $region17
  $region16: #{_mtl_loss_impl.2} parent=0 // pred_region
    _
  $region17: #{_mtl_loss_impl.2} parent=0 // pred_fallthru
    _
  // Predicated region
  $region18: #{_mtl_loss_impl.2} parent=0 // pred_check
    _
  $region19: #{_mtl_loss_impl.2} parent=0 // pred_check_branch
    %73 = sbr.rel (0) target = $region21
  $region20: #{_mtl_loss_impl.2} parent=0 // pred_region
    _
  $region21: #{_mtl_loss_impl.2} parent=0 // pred_fallthru
    _

// kernel: _mtl_loss_impl.3
$region0: #{_mtl_loss_impl.3}
  #allocation0 [shape = 'u32[]', space=smem, size = 0x4, offset = 0x4, fixed_abs, tag = 'smem constant byte address 0x4 - core index']
  #allocation1 [shape = 'u32[144,128]{1,0:T(1,128)}', space=vmem, size = 0x12000, scoped, tag = 'internal scratch']
  %s0 = inlined_call_operand.vmem [shape: f32[256,128], index: 0, kind: input, shape index: {}]
  %s1 = inlined_call_operand.vmem [shape: f32[256,128], index: 1, kind: input, shape index: {}]
  %s2 = inlined_call_operand.vmem [shape: f32[1,8,128], index: 2, kind: output, shape index: {}]
  %s3 = sld [smem:[#allocation0]]
  $region22: #{_mtl_loss_impl.3} parent=0
    _
  %s5 = ssub.s32 1, %s3
  %s6 = scalar_select 0, %s5, %s3
  // Predicated region
  $region2: #{_mtl_loss_impl.3} parent=0 // pred_check
    _
  $region3: #{_mtl_loss_impl.3} parent=0 // pred_check_branch
    %8 = sbr.rel (0) target = $region5
  $region4: #{_mtl_loss_impl.3} parent=0 // pred_region
    _
  $region5: #{_mtl_loss_impl.3} parent=0 // pred_fallthru
    _
  // Predicated region
  $region6: #{_mtl_loss_impl.3} parent=0 // pred_check
    _
  $region7: #{_mtl_loss_impl.3} parent=0 // pred_check_branch
    %10 = sbr.rel (0) target = $region9
  $region8: #{_mtl_loss_impl.3} parent=0 // pred_region
    _
  $region9: #{_mtl_loss_impl.3} parent=0 // pred_fallthru
    _
  %p11 = scmp.eq.s32.totalorder 0, 0
  // Predicated region
  $region10: #{_mtl_loss_impl.3} parent=0 // pred_check
    %p12 = pneg %p11
  $region11: #{_mtl_loss_impl.3} parent=0 // pred_check_branch
    %14 = sbr.rel (%p12) target = $region13
  $region12: #{_mtl_loss_impl.3} parent=0 // pred_region
    %15 = vst [vmem:[%s2] sm:$0xff] 0.0
  $region13: #{_mtl_loss_impl.3} parent=0 // pred_fallthru
    _
  %v16 = vld [vmem:[%s0] sm:$0xff]
  %v17 = vld [vmem:[%s0 + $0x8] sm:$0xff]
  %v18 = vld [vmem:[%s0 + $0x10] sm:$0xff]
  %v19 = vld [vmem:[%s0 + $0x18] sm:$0xff]
  %v20 = vld [vmem:[%s0 + $0x20] sm:$0xff]
  %v21 = vld [vmem:[%s0 + $0x28] sm:$0xff]
  %v22 = vld [vmem:[%s0 + $0x30] sm:$0xff]
  %v23 = vld [vmem:[%s0 + $0x38] sm:$0xff]
  %v24 = vld [vmem:[%s0 + $0x40] sm:$0xff]
  %v25 = vld [vmem:[%s0 + $0x48] sm:$0xff]
  %v26 = vld [vmem:[%s0 + $0x50] sm:$0xff]
  %v27 = vld [vmem:[%s0 + $0x58] sm:$0xff]
  %v28 = vld [vmem:[%s0 + $0x60] sm:$0xff]
  %v29 = vld [vmem:[%s0 + $0x68] sm:$0xff]
  %v30 = vld [vmem:[%s0 + $0x70] sm:$0xff]
  %v31 = vld [vmem:[%s0 + $0x78] sm:$0xff]
  %v32 = vld [vmem:[%s0 + $0x80] sm:$0xff]
  %v33 = vld [vmem:[%s0 + $0x88] sm:$0xff]
  %v34 = vld [vmem:[%s0 + $0x90] sm:$0xff]
  %v35 = vld [vmem:[%s0 + $0x98] sm:$0xff]
  %v36 = vld [vmem:[%s0 + $0xa0] sm:$0xff]
  %v37 = vld [vmem:[%s0 + $0xa8] sm:$0xff]
  %v38 = vld [vmem:[%s0 + $0xb0] sm:$0xff]
  %v39 = vld [vmem:[%s0 + $0xb8] sm:$0xff]
  %v40 = vld [vmem:[%s0 + $0xc0] sm:$0xff]
  %v41 = vld [vmem:[%s0 + $0xc8] sm:$0xff]
  %v42 = vld [vmem:[%s0 + $0xd0] sm:$0xff]
  %v43 = vld [vmem:[%s0 + $0xd8] sm:$0xff]
  %v44 = vld [vmem:[%s0 + $0xe0] sm:$0xff]
  %v45 = vld [vmem:[%s0 + $0xe8] sm:$0xff]
  %v46 = vld [vmem:[%s0 + $0xf0] sm:$0xff]
  %v47 = vld [vmem:[%s0 + $0xf8] sm:$0xff]
  %v48 = vld [vmem:[%s1] sm:$0xff]
  %v49 = vld [vmem:[%s1 + $0x8] sm:$0xff]
  %v50 = vld [vmem:[%s1 + $0x10] sm:$0xff]
  %v51 = vld [vmem:[%s1 + $0x18] sm:$0xff]
  %v52 = vld [vmem:[%s1 + $0x20] sm:$0xff]
  %v53 = vld [vmem:[%s1 + $0x28] sm:$0xff]
  %v54 = vld [vmem:[%s1 + $0x30] sm:$0xff]
  %v55 = vld [vmem:[%s1 + $0x38] sm:$0xff]
  %v56 = vld [vmem:[%s1 + $0x40] sm:$0xff]
  %v57 = vld [vmem:[%s1 + $0x48] sm:$0xff]
  %v58 = vld [vmem:[%s1 + $0x50] sm:$0xff]
  %v59 = vld [vmem:[%s1 + $0x58] sm:$0xff]
  %v60 = vld [vmem:[%s1 + $0x60] sm:$0xff]
  %v61 = vld [vmem:[%s1 + $0x68] sm:$0xff]
  %v62 = vld [vmem:[%s1 + $0x70] sm:$0xff]
  %v63 = vld [vmem:[%s1 + $0x78] sm:$0xff]
  %v64 = vld [vmem:[%s1 + $0x80] sm:$0xff]
  %v65 = vld [vmem:[%s1 + $0x88] sm:$0xff]
  %v66 = vld [vmem:[%s1 + $0x90] sm:$0xff]
  %v67 = vld [vmem:[%s1 + $0x98] sm:$0xff]
  %v68 = vld [vmem:[%s1 + $0xa0] sm:$0xff]
  %v69 = vld [vmem:[%s1 + $0xa8] sm:$0xff]
  %v70 = vld [vmem:[%s1 + $0xb0] sm:$0xff]
  %v71 = vld [vmem:[%s1 + $0xb8] sm:$0xff]
  %v72 = vld [vmem:[%s1 + $0xc0] sm:$0xff]
  %v73 = vld [vmem:[%s1 + $0xc8] sm:$0xff]
  %v74 = vld [vmem:[%s1 + $0xd0] sm:$0xff]
  %v75 = vld [vmem:[%s1 + $0xd8] sm:$0xff]
  %v76 = vld [vmem:[%s1 + $0xe0] sm:$0xff]
  %v77 = vld [vmem:[%s1 + $0xe8] sm:$0xff]
  %v78 = vld [vmem:[%s1 + $0xf0] sm:$0xff]
  %v79 = vld [vmem:[%s1 + $0xf8] sm:$0xff]
  %v80 = vsub.f32 %v16, %v48
  %v81 = vsub.f32 %v17, %v49
  %v82 = vsub.f32 %v18, %v50
  %v83 = vsub.f32 %v19, %v51
  %v84 = vsub.f32 %v20, %v52
  %v85 = vsub.f32 %v21, %v53
  %v86 = vsub.f32 %v22, %v54
  %v87 = vsub.f32 %v23, %v55
  %v88 = vsub.f32 %v24, %v56
  %v89 = vsub.f32 %v25, %v57
  %v90 = vsub.f32 %v26, %v58
  %v91 = vsub.f32 %v27, %v59
  %v92 = vsub.f32 %v28, %v60
  %v93 = vsub.f32 %v29, %v61
  %v94 = vsub.f32 %v30, %v62
  %v95 = vsub.f32 %v31, %v63
  %v96 = vsub.f32 %v32, %v64
  %v97 = vsub.f32 %v33, %v65
  %v98 = vsub.f32 %v34, %v66
  %v99 = vsub.f32 %v35, %v67
  %v100 = vsub.f32 %v36, %v68
  %v101 = vsub.f32 %v37, %v69
  %v102 = vsub.f32 %v38, %v70
  %v103 = vsub.f32 %v39, %v71
  %v104 = vsub.f32 %v40, %v72
  %v105 = vsub.f32 %v41, %v73
  %v106 = vsub.f32 %v42, %v74
  %v107 = vsub.f32 %v43, %v75
  %v108 = vsub.f32 %v44, %v76
  %v109 = vsub.f32 %v45, %v77
  %v110 = vsub.f32 %v46, %v78
  %v111 = vsub.f32 %v47, %v79
  %v112 = vand.u32 2147483647, %v80
  %v113 = vand.u32 2147483647, %v81
  %v114 = vand.u32 2147483647, %v82
  %v115 = vand.u32 2147483647, %v83
  %v116 = vand.u32 2147483647, %v84
  %v117 = vand.u32 2147483647, %v85
  %v118 = vand.u32 2147483647, %v86
  %v119 = vand.u32 2147483647, %v87
  %v120 = vand.u32 2147483647, %v88
  %v121 = vand.u32 2147483647, %v89
  %v122 = vand.u32 2147483647, %v90
  %v123 = vand.u32 2147483647, %v91
  %v124 = vand.u32 2147483647, %v92
  %v125 = vand.u32 2147483647, %v93
  %v126 = vand.u32 2147483647, %v94
  %v127 = vand.u32 2147483647, %v95
  %v128 = vand.u32 2147483647, %v96
  %v129 = vand.u32 2147483647, %v97
  %v130 = vand.u32 2147483647, %v98
  %v131 = vand.u32 2147483647, %v99
  %v132 = vand.u32 2147483647, %v100
  %v133 = vand.u32 2147483647, %v101
  %v134 = vand.u32 2147483647, %v102
  %v135 = vand.u32 2147483647, %v103
  %v136 = vand.u32 2147483647, %v104
  %v137 = vand.u32 2147483647, %v105
  %v138 = vand.u32 2147483647, %v106
  %v139 = vand.u32 2147483647, %v107
  %v140 = vand.u32 2147483647, %v108
  %v141 = vand.u32 2147483647, %v109
  %v142 = vand.u32 2147483647, %v110
  %v143 = vand.u32 2147483647, %v111
  %v144 = vld [vmem:[%s2] sm:$0xff]
  %v145 = vadd.f32 %v112, %v113
  %v146 = vadd.f32 %v145, %v114
  %v147 = vadd.f32 %v146, %v115
  %v148 = vadd.f32 %v147, %v116
  %v149 = vadd.f32 %v148, %v117
  %v150 = vadd.f32 %v149, %v118
  %v151 = vadd.f32 %v150, %v119
  %v152 = vadd.f32 %v151, %v120
  %v153 = vadd.f32 %v152, %v121
  %v154 = vadd.f32 %v153, %v122
  %v155 = vadd.f32 %v154, %v123
  %v156 = vadd.f32 %v155, %v124
  %v157 = vadd.f32 %v156, %v125
  %v158 = vadd.f32 %v157, %v126
  %v159 = vadd.f32 %v158, %v127
  %v160 = vadd.f32 %v159, %v128
  %v161 = vadd.f32 %v160, %v129
  %v162 = vadd.f32 %v161, %v130
  %v163 = vadd.f32 %v162, %v131
  %v164 = vadd.f32 %v163, %v132
  %v165 = vadd.f32 %v164, %v133
  %v166 = vadd.f32 %v165, %v134
  %v167 = vadd.f32 %v166, %v135
  %v168 = vadd.f32 %v167, %v136
  %v169 = vadd.f32 %v168, %v137
  %v170 = vadd.f32 %v169, %v138
  %v171 = vadd.f32 %v170, %v139
  %v172 = vadd.f32 %v171, %v140
  %v173 = vadd.f32 %v172, %v141
  %v174 = vadd.f32 %v173, %v142
  %v175 = vadd.f32 %v174, %v143
  %v176 = vadd.f32 %v144, %v175
  %177 = vst [vmem:[%s2] sm:$0xff] %v176
  // Predicated region
  $region14: #{_mtl_loss_impl.3} parent=0 // pred_check
    _
  $region15: #{_mtl_loss_impl.3} parent=0 // pred_check_branch
    %179 = sbr.rel (0) target = $region17
  $region16: #{_mtl_loss_impl.3} parent=0 // pred_region
    _
  $region17: #{_mtl_loss_impl.3} parent=0 // pred_fallthru
    _
  // Predicated region
  $region18: #{_mtl_loss_impl.3} parent=0 // pred_check
    _
  $region19: #{_mtl_loss_impl.3} parent=0 // pred_check_branch
    %181 = sbr.rel (0) target = $region21
  $region20: #{_mtl_loss_impl.3} parent=0 // pred_region
    _
  $region21: #{_mtl_loss_impl.3} parent=0 // pred_fallthru
    _

</llo_original>
